<compile_context>
chip_gen: v5e
topology: v5e:2x2
jax: 0.10.0
libtpu: 0.0.40
codegen_flags: <defaults>
</compile_context>

<pallas_src>
import functools

import jax
import jax.numpy as jnp
from jax import lax
from jax.experimental import pallas as pl
from jax.experimental.pallas import tpu as pltpu

_NEG_BIG = -1e30  # finite f32 stand-in for -inf; all softmax math stays in f32


def _round_up(x, m):
    return (x + m - 1) // m * m


def _vmem_capacity_bytes():
    try:
        return int(pltpu.get_tpu_info().vmem_capacity_bytes)
    except Exception:
        return 64 * 1024 * 1024  # safe for every generation (v7x has 64 MiB / core)


def _adaptive_ls_kernel(tbl_ref, nneed_ref, bmin_ref, bmax_ref,        # SMEM scalar prefetch
                        hidden_ref, meta_ref, w_ref, bias_ref,          # VMEM inputs
                        out_ref,                                        # (tb, 1) f32 output
                        m_head_ref, l_head_ref, m_own_ref, l_own_ref,   # (nb, tb, 1) scratch
                        tgt_ref, clu_ref,
                        *, seg_bounds, head_size, n_clusters, total_real, hidden_resident):
    t = pl.program_id(0)          # column-tile axis (outer, "arbitrary")
    b = pl.program_id(1)          # batch-tile axis (inner, "parallel")
    nt = pl.num_programs(0)
    n_seg = n_clusters + 1
    tb = meta_ref.shape[0]
    tn = w_ref.shape[1]

    # ---------------- init per batch tile ----------------
    @pl.when(t == 0)
    def _init():
        neg = jnp.full((tb, 1), _NEG_BIG, jnp.float32)
        zero = jnp.zeros((tb, 1), jnp.float32)
        m_head_ref[b] = neg
        m_own_ref[b] = neg
        l_head_ref[b] = zero
        l_own_ref[b] = zero
        tgt_ref[b] = zero
        clu_ref[b] = zero

    # ---------------- which combined columns does this step cover? ----------------
    tile_id = tbl_ref[t]
    c_lo = tile_id * tn
    c_hi = jnp.minimum(c_lo + tn, total_real) - 1
    lo_seg = jnp.int32(0)
    hi_seg = jnp.int32(0)
    for s in range(1, n_seg):
        lo_seg = lo_seg + (c_lo >= seg_bounds[s]).astype(jnp.int32)
        hi_seg = hi_seg + (c_hi >= seg_bounds[s]).astype(jnp.int32)
    has_head = lo_seg == 0
    has_tail = hi_seg >= 1
    bmin = bmin_ref[b]
    bmax = bmax_ref[b]
    need_tail = has_tail & (jnp.maximum(lo_seg, 1) <= bmax) & (hi_seg >= bmin)
    compute_ok = (t < nneed_ref[0]) & (has_head | need_tail)

    @pl.when(compute_ok)
    def _compute():
        if hidden_resident:
            row0 = pl.multiple_of(b * tb, tb)
            h = hidden_ref[pl.ds(row0, tb), :]                 # [tb, H]
        else:
            h = hidden_ref[...]                                # [tb, H]
        # MXU-native [M,K] x [K,N] matmul with f32 accumulation.
        logits = lax.dot_general(h, w_ref[...], (((1,), (0,)), ((), ())),
                                 preferred_element_type=jnp.float32)
        logits = logits + bias_ref[...]                        # [tb, tn] f32
        gcol = c_lo + lax.broadcasted_iota(jnp.int32, (1, tn), 1)

        meta = meta_ref[...]                                   # [tb, 4] int32
        tgt_col = meta[:, 0:1]
        tgt2_col = meta[:, 1:2]
        own_lo = meta[:, 2:3]
        own_hi = meta[:, 3:4]

        # Logit at each row's own (combined) target column: exactly one hit overall.
        tgt_ref[b] = tgt_ref[b] + jnp.sum(jnp.where(gcol == tgt_col, logits, 0.0),
                                          axis=1, keepdims=True)

        @pl.when(has_head)
        def _head():
            # Head "cluster" column logit (head column head_size - s for cluster s).
            clu_ref[b] = clu_ref[b] + jnp.sum(jnp.where(gcol == tgt2_col, logits, 0.0),
                                              axis=1, keepdims=True)
            # Online LSE over the head columns of this tile (same for every row).
            hlog = jnp.where(gcol < head_size, logits, _NEG_BIG)
            tmax = jnp.max(hlog, axis=1, keepdims=True)
            m_old = m_head_ref[b]
            m_new = jnp.maximum(m_old, tmax)
            e = jnp.exp(hlog - m_new)
            l_head_ref[b] = (l_head_ref[b] * jnp.exp(m_old - m_new)
                             + jnp.sum(e, axis=1, keepdims=True))
            m_head_ref[b] = m_new

        @pl.when(has_tail)
        def _own():
            # Online LSE over each row's OWN tail-cluster columns only (row-dependent mask).
            om = (gcol >= own_lo) & (gcol < own_hi)
            tmax = jnp.max(jnp.where(om, logits, _NEG_BIG), axis=1, keepdims=True)
            m_old = m_own_ref[b]
            m_new = jnp.maximum(m_old, tmax)
            # Mask AFTER exp: rows with no own column here keep m_new == _NEG_BIG and must
            # not accumulate exp(0) == 1 per column.
            e = jnp.where(om, jnp.exp(logits - m_new), 0.0)
            l_own_ref[b] = (l_own_ref[b] * jnp.exp(m_old - m_new)
                            + jnp.sum(e, axis=1, keepdims=True))
            m_own_ref[b] = m_new

    # ---------------- finalize per batch tile ----------------
    @pl.when(t == nt - 1)
    def _fin():
        tgt2_col = meta_ref[:, 1:2]
        lse_head = m_head_ref[b] + jnp.log(l_head_ref[b])
        lse_own = m_own_ref[b] + jnp.log(jnp.maximum(l_own_ref[b], 1e-30))
        is_head_row = tgt2_col < 0
        lp = jnp.where(is_head_row,
                       tgt_ref[b] - lse_head,
                       (clu_ref[b] - lse_head) + (tgt_ref[b] - lse_own))
        out_ref[...] = -lp


def prepare_adaptive_softmax_params(weight, bias, cluster_weight, cluster_bias,
                                    cutoffs, *, block_n=512, param_dtype=None):
    """One-time parameter prep (hoist out of the hot path and cache across steps):
    builds the combined [head ; tail] weight, pre-transposed to MXU-native [H, cols]."""
    n_classes, in_features = weight.shape
    cutoffs = list(cutoffs)
    cutoffs_full = cutoffs + [n_classes]
    shortlist = cutoffs_full[0]
    n_clusters = len(cutoffs_full) - 1
    head_size = shortlist + n_clusters
    total_real = head_size + (n_classes - shortlist)          # = n_classes + n_clusters
    seg_bounds = tuple([0, head_size] +
                       [head_size + c - shortlist for c in cutoffs_full[1:]])

    tn = max(128, min(_round_up(block_n, 128), _round_up(total_real, 128)))
    total_pad = _round_up(total_real, tn)
    nt = total_pad // tn

    dt = weight.dtype if param_dtype is None else param_dtype
    w_all = jnp.concatenate([weight[:shortlist],
                             cluster_weight.astype(weight.dtype),
                             weight[shortlist:]], axis=0)
    b_all = jnp.concatenate([bias[:shortlist],
                             cluster_bias.astype(bias.dtype),
                             bias[shortlist:]], axis=0)
    # Pre-transpose to [K, N] = [H, total_pad] (one-time cost; avoids per-tile RHS transpose).
    w_all = jnp.pad(w_all, ((0, total_pad - total_real), (0, 0))).astype(dt).T
    b_all = jnp.pad(b_all, (0, total_pad - total_real)).astype(jnp.float32)[None, :]

    # Static per-column-tile segment overlap (used for tile-table DMA skipping).
    tile_has_head = []
    tile_clusters = []
    for j in range(nt):
        c_lo = j * tn
        c_hi = min(c_lo + tn, total_real) - 1
        tile_has_head.append(bool(c_lo < head_size))
        row = []
        for s in range(1, n_clusters + 1):
            lo, hi = seg_bounds[s], seg_bounds[s + 1]
            row.append(bool((c_lo < hi) and (c_hi >= lo)))
        tile_clusters.append(tuple(row))

    geom = dict(n_classes=n_classes, in_features=in_features, cutoffs=cutoffs,
                shortlist=shortlist, n_clusters=n_clusters, head_size=head_size,
                total_real=total_real, total_pad=total_pad, tn=tn, nt=nt,
                seg_bounds=seg_bounds,
                tile_has_head=tuple(tile_has_head),
                tile_clusters=tuple(tile_clusters))
    return w_all, b_all, geom


def adaptive_logsoftmax(hidden, target, weight, bias, cluster_weight, cluster_bias,
                        cutoffs, keep_order=False, *, block_b=512, block_n=512,
                        prepared=None, resident_hidden=None):
    """Forward pass of the (transformer-XL style) AdaptiveLogSoftmax module.
    `cutoffs` excludes n_classes (as in the module __init__)."""
    if prepared is None:
        prepared = prepare_adaptive_softmax_params(
            weight, bias, cluster_weight, cluster_bias, cutoffs,
            block_n=block_n, param_dtype=hidden.dtype)
    w_all, b_all, g = prepared

    B, H = hidden.shape
    assert target.shape[0] == B
    assert H == g["in_features"]
    dtype = hidden.dtype
    shortlist = g["shortlist"]
    n_clusters = g["n_clusters"]
    head_size = g["head_size"]
    tn = g["tn"]
    nt = g["nt"]

    # ---- batch tiling (prefer >=2 tiles so both v7x TensorCores get work) ----
    tb = max(8, min(_round_up(block_b, 8), _round_up(B, 8)))
    if B >= 16 and (B + tb - 1) // tb < 2:
        tb = max(8, _round_up((B + 1) // 2, 8))
    B_pad = _round_up(B, tb)
    nb = B_pad // tb

    # ---- group rows by target cluster (== the torch keep_order=False output order) ----
    target = target.astype(jnp.int32)
    cut_arr = jnp.asarray(g["cutoffs"], dtype=jnp.int32)
    cluster_id = jnp.sum((target[:, None] >= cut_arr[None, :]).astype(jnp.int32), axis=1)
    order = jnp.argsort(cluster_id, stable=True)
    hidden_s = hidden[order]
    target_s = target[order]
    cid_s = cluster_id[order]

    sb = jnp.asarray(g["seg_bounds"], dtype=jnp.int32)
    tgt_col = jnp.where(cid_s == 0, target_s, target_s - shortlist + head_size)
    tgt2_col = jnp.where(cid_s == 0, -1, head_size - cid_s)          # head cluster column
    own_lo = jnp.where(cid_s == 0, -1, jnp.take(sb, cid_s))
    own_hi = jnp.where(cid_s == 0, -1, jnp.take(sb, cid_s + 1))
    meta = jnp.stack([tgt_col, tgt2_col, own_lo, own_hi], axis=1).astype(jnp.int32)

    pad_b = B_pad - B
    hidden_p = jnp.pad(hidden_s, ((0, pad_b), (0, 0)))
    meta_p = jnp.pad(meta, ((0, pad_b), (0, 0)))
    cid_p = jnp.pad(cid_s, (0, pad_b))

    # Per-batch-tile [min, max] tail cluster present -> per-(b, t) compute skipping.
    cid_tiles = cid_p.reshape(nb, tb)
    bmax = jnp.max(cid_tiles, axis=1).astype(jnp.int32)
    bmin = jnp.min(jnp.where(cid_tiles >= 1, cid_tiles, n_clusters + 1),
                   axis=1).astype(jnp.int32)

    # Column tiles actually needed by this batch: head tiles + tiles of present clusters.
    # Padded table slots repeat the last needed tile id, so Pallas never DMAs them.
    present = jnp.any(cid_s[None, :] ==
                      jnp.arange(1, n_clusters + 1, dtype=jnp.int32)[:, None], axis=1)
    tile_head = jnp.asarray(g["tile_has_head"], dtype=bool)
    tile_clu = jnp.asarray(g["tile_clusters"], dtype=bool).reshape(nt, n_clusters)
    needed = tile_head | jnp.any(tile_clu & present[None, :], axis=1)
    order_tiles = jnp.argsort(~needed, stable=True).astype(jnp.int32)
    n_needed = jnp.sum(needed).astype(jnp.int32)
    last_needed = order_tiles[jnp.maximum(n_needed, 1) - 1]
    tile_tbl = jnp.where(jnp.arange(nt) < n_needed, order_tiles, last_needed).astype(jnp.int32)
    n_needed = n_needed.reshape(1)

    # ---- VMEM budget / hidden residency (derived from the actual chip) ----
    cap = _vmem_capacity_bytes()
    itm = jnp.dtype(dtype).itemsize
    fixed = (2 * H * tn * itm                 # weight tiles (double buffered)
             + 2 * tn * 4                     # bias tiles
             + 4 * tb * 128 * 4               # meta + out blocks (lane padded)
             + 6 * nb * tb * 128 * 4          # per-row f32 running stats (lane padded)
             + 4 * tb * tn * 4)               # live f32 logits / exp intermediates
    hid_res = 2 * B_pad * H * itm
    hid_stream = 2 * tb * H * itm
    if resident_hidden is None:
        resident = (fixed + hid_res) <= int(0.7 * cap)
    else:
        resident = bool(resident_hidden)
    est = fixed + (hid_res if resident else hid_stream)
    vmem_limit = int(min(max(2 * est, 32 * 1024 * 1024), int(0.85 * cap)))

    if resident:
        hidden_spec = pl.BlockSpec((B_pad, H), lambda t, b, *_: (0, 0))
    else:
        hidden_spec = pl.BlockSpec((tb, H), lambda t, b, *_: (b, 0))

    kernel = functools.partial(
        _adaptive_ls_kernel,
        seg_bounds=g["seg_bounds"], head_size=head_size, n_clusters=n_clusters,
        total_real=g["total_real"], hidden_resident=resident)

    out = pl.pallas_call(
        kernel,
        out_shape=jax.ShapeDtypeStruct((B_pad, 1), jnp.float32),
        grid_spec=pltpu.PrefetchScalarGridSpec(
            num_scalar_prefetch=4,
            grid=(nt, nb),                                       # column tiles outer!
            in_specs=[
                hidden_spec,                                     # hidden rows
                pl.BlockSpec((tb, 4), lambda t, b, *_: (b, 0)),  # per-row int metadata
                pl.BlockSpec((H, tn), lambda t, b, tbl, *_: (0, tbl[t])),   # weight [K,N]
                pl.BlockSpec((1, tn), lambda t, b, tbl, *_: (0, tbl[t])),   # bias
            ],
            out_specs=pl.BlockSpec((tb, 1), lambda t, b, *_: (b, 0)),
            scratch_shapes=[pltpu.VMEM((nb, tb, 1), jnp.float32)] * 6),
        compiler_params=pltpu.CompilerParams(
            dimension_semantics=("arbitrary", "parallel"),
            vmem_limit_bytes=vmem_limit),
    )(tile_tbl, n_needed, bmin, bmax, hidden_p, meta_p, w_all, b_all)

    nll_sorted = out[:B, 0].astype(dtype)
    if keep_order:
        return jnp.zeros((B,), dtype).at[order].set(nll_sorted)
    # torch keep_order=False writes clusters contiguously in cluster order (stable within
    # a cluster) == exactly the cluster-grouped order the kernel already produced.
    return nll_sorted


def _reference(hidden, target, weight, bias, cluster_weight, cluster_bias,
               cutoffs, keep_order=False):
    """Pure-JAX re-implementation of the PyTorch forward (for verification)."""
    n_classes = weight.shape[0]
    full_cutoffs = list(cutoffs) + [n_classes]
    shortlist = full_cutoffs[0]
    head_w = jnp.concatenate([weight[:shortlist], cluster_weight], axis=0)
    head_b = jnp.concatenate([bias[:shortlist], cluster_bias], axis=0)
    head_lp = jax.nn.log_softmax(hidden @ head_w.T + head_b, axis=1)
    B = hidden.shape[0]
    rows = jnp.arange(B)
    cutoff_values = [0] + full_cutoffs
    lp = jnp.zeros((B,), hidden.dtype)
    for i in range(len(cutoff_values) - 1):
        l, h = cutoff_values[i], cutoff_values[i + 1]
        mask = (target >= l) & (target < h)
        if i == 0:
            lpi = head_lp[rows, jnp.clip(target, 0, head_lp.shape[1] - 1)]
        else:
            tail_lp = jax.nn.log_softmax(hidden @ weight[l:h].T + bias[l:h], axis=1)
            lpi = head_lp[:, -i] + tail_lp[rows, jnp.clip(target - l, 0, h - l - 1)]
        lp = jnp.where(mask, lpi, lp)
    nll = -lp
    if not keep_order:
        cluster_id = jnp.sum(target[:, None] >= jnp.asarray(list(cutoffs))[None, :], axis=1)
        nll = nll[jnp.argsort(cluster_id, stable=True)]
    return nll


if __name__ == "__main__":
    keys = jax.random.split(jax.random.PRNGKey(0), 10)

    # ---- test 1: module defaults (cluster params zero-initialized, single tile) ----
    B, H, n_classes = 8, 32, 20
    cutoffs = [4, 10]
    hidden = jax.random.normal(keys[0], (B, H), dtype=jnp.float32)
    target = jax.random.randint(keys[1], (B,), 0, n_classes, dtype=jnp.int32)
    weight = 0.1 * jax.random.normal(keys[2], (n_classes, H), dtype=jnp.float32)
    bias = 0.1 * jax.random.normal(keys[3], (n_classes,), dtype=jnp.float32)
    cluster_weight = jnp.zeros((len(cutoffs), H), dtype=jnp.float32)
    cluster_bias = jnp.zeros((len(cutoffs),), dtype=jnp.float32)

    nll = adaptive_logsoftmax(hidden, target, weight, bias,
                              cluster_weight, cluster_bias, cutoffs)
    jax.block_until_ready(nll)
    ref = _reference(hidden, target, weight, bias, cluster_weight, cluster_bias, cutoffs)
    assert nll.shape == (B,) and nll.dtype == hidden.dtype
    assert jnp.allclose(nll, ref, atol=1e-4, rtol=1e-4), (nll, ref)

    nll_k = adaptive_logsoftmax(hidden, target, weight, bias,
                                cluster_weight, cluster_bias, cutoffs, keep_order=True)
    ref_k = _reference(hidden, target, weight, bias, cluster_weight, cluster_bias,
                       cutoffs, keep_order=True)
    assert jnp.allclose(nll_k, ref_k, atol=1e-4, rtol=1e-4), (nll_k, ref_k)

    # ---- test 2: multi batch-tile / multi column-tile path; last cluster absent so
    #      its column tile is dropped from the prefetched tile table (DMA skipped). ----
    B2, H2, n_classes2 = 96, 32, 300
    cutoffs2 = [32, 120, 220]
    hidden2 = jax.random.normal(keys[4], (B2, H2), dtype=jnp.float32)
    target2 = jax.random.randint(keys[5], (B2,), 0, 220, dtype=jnp.int32)   # cluster 3 absent
    weight2 = 0.1 * jax.random.normal(keys[6], (n_classes2, H2), dtype=jnp.float32)
    bias2 = 0.1 * jax.random.normal(keys[7], (n_classes2,), dtype=jnp.float32)
    cw2 = 0.1 * jax.random.normal(keys[8], (len(cutoffs2), H2), dtype=jnp.float32)
    cb2 = 0.1 * jax.random.normal(keys[9], (len(cutoffs2),), dtype=jnp.float32)
    ref2 = _reference(hidden2, target2, weight2, bias2, cw2, cb2, cutoffs2)

    # resident-hidden path, small tiles (3 batch tiles x 3 column tiles)
    nll2 = adaptive_logsoftmax(hidden2, target2, weight2, bias2, cw2, cb2, cutoffs2,
                               block_b=32, block_n=128)
    jax.block_until_ready(nll2)
    assert jnp.allclose(nll2, ref2, atol=1e-4, rtol=1e-4), (nll2, ref2)

    # streamed-hidden fallback path
    nll2s = adaptive_logsoftmax(hidden2, target2, weight2, bias2, cw2, cb2, cutoffs2,
                                block_b=32, block_n=128, resident_hidden=False)
    jax.block_until_ready(nll2s)
    assert jnp.allclose(nll2s, ref2, atol=1e-4, rtol=1e-4), (nll2s, ref2)

    # default tile sizes (forces >=2 batch tiles, single column tile)
    nll2d = adaptive_logsoftmax(hidden2, target2, weight2, bias2, cw2, cb2, cutoffs2)
    jax.block_until_ready(nll2d)
    assert jnp.allclose(nll2d, ref2, atol=1e-4, rtol=1e-4), (nll2d, ref2)

    print("KERNEL_OK")
</pallas_src>

<mosaic_0001>
module attributes {stable_mosaic.version = 11 : i64} {
  func.func @_adaptive_ls_kernel(%arg0: i32, %arg1: i32, %arg2: memref<1xi32, #tpu.memory_space<smem>>, %arg3: memref<1xi32, #tpu.memory_space<smem>>, %arg4: memref<1xi32, #tpu.memory_space<smem>>, %arg5: memref<1xi32, #tpu.memory_space<smem>>, %arg6: memref<8x32xf32, #tpu.memory_space<vmem>>, %arg7: memref<8x4xi32, #tpu.memory_space<vmem>>, %arg8: memref<32x128xf32, #tpu.memory_space<vmem>>, %arg9: memref<1x128xf32, #tpu.memory_space<vmem>>, %arg10: memref<8x1xf32, #tpu.memory_space<vmem>>, %arg11: memref<1x8x1xf32, #tpu.memory_space<vmem>>, %arg12: memref<1x8x1xf32, #tpu.memory_space<vmem>>, %arg13: memref<1x8x1xf32, #tpu.memory_space<vmem>>, %arg14: memref<1x8x1xf32, #tpu.memory_space<vmem>>, %arg15: memref<1x8x1xf32, #tpu.memory_space<vmem>>, %arg16: memref<1x8x1xf32, #tpu.memory_space<vmem>>) attributes {dimension_semantics = [#tpu.dimension_semantics<arbitrary>, #tpu.dimension_semantics<parallel>], iteration_bounds = array<i64: 1, 1>, scalar_prefetch = 4 : i64, scratch_operands = 6 : i64, tpu.core_type = #tpu.core_type<tc>, window_params = [{pipeline_mode = #tpu.pipeline_mode<synchronous>, transform_indices = @transform_0, window_bounds = array<i64: 8, 32>}, {transform_indices = @transform_1, window_bounds = array<i64: 8, 4>}, {transform_indices = @transform_2, window_bounds = array<i64: 32, 128>}, {transform_indices = @transform_3, window_bounds = array<i64: 1, 128>}, {transform_indices = @transform_4, window_bounds = array<i64: 8, 1>}]} {
    %c0_i32 = arith.constant 0 : i32
    %0 = arith.cmpi eq, %arg0, %c0_i32 : i32
    %1 = arith.extui %0 : i1 to i32
    %c0_i32_0 = arith.constant 0 : i32
    %2 = arith.cmpi ne, %1, %c0_i32_0 : i32
    scf.if %2 {
      %cst = arith.constant -1.000000e+30 : f32
      %41 = vector.broadcast %cst : f32 to vector<8x1xf32>
      %cst_12 = arith.constant 0.000000e+00 : f32
      %42 = vector.broadcast %cst_12 : f32 to vector<8x1xf32>
      %43 = arith.index_cast %arg1 : i32 to index
      %c0_13 = arith.constant 0 : index
      %c0_14 = arith.constant 0 : index
      %44 = vector.load %arg11[%43, %c0_13, %c0_14] : memref<1x8x1xf32, #tpu.memory_space<vmem>>, vector<1x8x1xf32>
      %45 = vector.shape_cast %44 : vector<1x8x1xf32> to vector<8x1xf32>
      %46 = vector.shape_cast %41 : vector<8x1xf32> to vector<1x8x1xf32>
      tpu.vector_store %arg11[%43, %c0_13, %c0_14], %46 {strides = array<i32>} : memref<1x8x1xf32, #tpu.memory_space<vmem>>, vector<1x8x1xf32>,
      %47 = arith.index_cast %arg1 : i32 to index
      %c0_15 = arith.constant 0 : index
      %c0_16 = arith.constant 0 : index
      %48 = vector.load %arg13[%47, %c0_15, %c0_16] : memref<1x8x1xf32, #tpu.memory_space<vmem>>, vector<1x8x1xf32>
      %49 = vector.shape_cast %48 : vector<1x8x1xf32> to vector<8x1xf32>
      %50 = vector.shape_cast %41 : vector<8x1xf32> to vector<1x8x1xf32>
      tpu.vector_store %arg13[%47, %c0_15, %c0_16], %50 {strides = array<i32>} : memref<1x8x1xf32, #tpu.memory_space<vmem>>, vector<1x8x1xf32>,
      %51 = arith.index_cast %arg1 : i32 to index
      %c0_17 = arith.constant 0 : index
      %c0_18 = arith.constant 0 : index
      %52 = vector.load %arg12[%51, %c0_17, %c0_18] : memref<1x8x1xf32, #tpu.memory_space<vmem>>, vector<1x8x1xf32>
      %53 = vector.shape_cast %52 : vector<1x8x1xf32> to vector<8x1xf32>
      %54 = vector.shape_cast %42 : vector<8x1xf32> to vector<1x8x1xf32>
      tpu.vector_store %arg12[%51, %c0_17, %c0_18], %54 {strides = array<i32>} : memref<1x8x1xf32, #tpu.memory_space<vmem>>, vector<1x8x1xf32>,
      %55 = arith.index_cast %arg1 : i32 to index
      %c0_19 = arith.constant 0 : index
      %c0_20 = arith.constant 0 : index
      %56 = vector.load %arg14[%55, %c0_19, %c0_20] : memref<1x8x1xf32, #tpu.memory_space<vmem>>, vector<1x8x1xf32>
      %57 = vector.shape_cast %56 : vector<1x8x1xf32> to vector<8x1xf32>
      %58 = vector.shape_cast %42 : vector<8x1xf32> to vector<1x8x1xf32>
      tpu.vector_store %arg14[%55, %c0_19, %c0_20], %58 {strides = array<i32>} : memref<1x8x1xf32, #tpu.memory_space<vmem>>, vector<1x8x1xf32>,
      %59 = arith.index_cast %arg1 : i32 to index
      %c0_21 = arith.constant 0 : index
      %c0_22 = arith.constant 0 : index
      %60 = vector.load %arg15[%59, %c0_21, %c0_22] : memref<1x8x1xf32, #tpu.memory_space<vmem>>, vector<1x8x1xf32>
      %61 = vector.shape_cast %60 : vector<1x8x1xf32> to vector<8x1xf32>
      %62 = vector.shape_cast %42 : vector<8x1xf32> to vector<1x8x1xf32>
      tpu.vector_store %arg15[%59, %c0_21, %c0_22], %62 {strides = array<i32>} : memref<1x8x1xf32, #tpu.memory_space<vmem>>, vector<1x8x1xf32>,
      %63 = arith.index_cast %arg1 : i32 to index
      %c0_23 = arith.constant 0 : index
      %c0_24 = arith.constant 0 : index
      %64 = vector.load %arg16[%63, %c0_23, %c0_24] : memref<1x8x1xf32, #tpu.memory_space<vmem>>, vector<1x8x1xf32>
      %65 = vector.shape_cast %64 : vector<1x8x1xf32> to vector<8x1xf32>
      %66 = vector.shape_cast %42 : vector<8x1xf32> to vector<1x8x1xf32>
      tpu.vector_store %arg16[%63, %c0_23, %c0_24], %66 {strides = array<i32>} : memref<1x8x1xf32, #tpu.memory_space<vmem>>, vector<1x8x1xf32>,
    } else {
    }
    %3 = arith.index_cast %arg0 : i32 to index
    %4 = memref.load %arg2[%3] : memref<1xi32, #tpu.memory_space<smem>>
    %c128_i32 = arith.constant 128 : i32
    %5 = arith.muli %4, %c128_i32 : i32
    %c128_i32_1 = arith.constant 128 : i32
    %6 = arith.addi %5, %c128_i32_1 : i32
    %c22_i32 = arith.constant 22 : i32
    %7 = arith.minsi %6, %c22_i32 : i32
    %c1_i32 = arith.constant 1 : i32
    %8 = arith.subi %7, %c1_i32 : i32
    %c6_i32 = arith.constant 6 : i32
    %9 = arith.cmpi sge, %5, %c6_i32 : i32
    %10 = arith.extui %9 : i1 to i32
    %c0_i32_2 = arith.constant 0 : i32
    %11 = arith.addi %c0_i32_2, %10 : i32
    %c6_i32_3 = arith.constant 6 : i32
    %12 = arith.cmpi sge, %8, %c6_i32_3 : i32
    %13 = arith.extui %12 : i1 to i32
    %c0_i32_4 = arith.constant 0 : i32
    %14 = arith.addi %c0_i32_4, %13 : i32
    %c12_i32 = arith.constant 12 : i32
    %15 = arith.cmpi sge, %5, %c12_i32 : i32
    %16 = arith.extui %15 : i1 to i32
    %17 = arith.addi %11, %16 : i32
    %c12_i32_5 = arith.constant 12 : i32
    %18 = arith.cmpi sge, %8, %c12_i32_5 : i32
    %19 = arith.extui %18 : i1 to i32
    %20 = arith.addi %14, %19 : i32
    %c0_i32_6 = arith.constant 0 : i32
    %21 = arith.cmpi eq, %17, %c0_i32_6 : i32
    %c1_i32_7 = arith.constant 1 : i32
    %22 = arith.cmpi sge, %20, %c1_i32_7 : i32
    %23 = arith.index_cast %arg1 : i32 to index
    %24 = memref.load %arg4[%23] : memref<1xi32, #tpu.memory_space<smem>>
    %25 = arith.index_cast %arg1 : i32 to index
    %26 = memref.load %arg5[%25] : memref<1xi32, #tpu.memory_space<smem>>
    %c1_i32_8 = arith.constant 1 : i32
    %27 = arith.maxsi %17, %c1_i32_8 : i32
    %28 = arith.cmpi sle, %27, %26 : i32
    %29 = arith.andi %22, %28 : i1
    %30 = arith.cmpi sge, %20, %24 : i32
    %31 = arith.andi %29, %30 : i1
    %c0 = arith.constant 0 : index
    %32 = memref.load %arg3[%c0] : memref<1xi32, #tpu.memory_space<smem>>
    %33 = arith.cmpi slt, %arg0, %32 : i32
    %34 = arith.ori %21, %31 : i1
    %35 = arith.andi %33, %34 : i1
    %36 = arith.extui %35 : i1 to i32
    %c0_i32_9 = arith.constant 0 : i32
    %37 = arith.cmpi ne, %36, %c0_i32_9 : i32
    scf.if %37 {
      %c8_i32 = arith.constant 8 : i32
      %41 = arith.muli %arg1, %c8_i32 : i32
      %42 = tpu.assume_multiple %41, 8 : i32
      %43 = arith.index_cast %42 : i32 to index
      %c0_12 = arith.constant 0 : index
      %44 = vector.load %arg6[%43, %c0_12] : memref<8x32xf32, #tpu.memory_space<vmem>>, vector<8x32xf32>
      %c0_13 = arith.constant 0 : index
      %c0_14 = arith.constant 0 : index
      %45 = vector.load %arg8[%c0_13, %c0_14] : memref<32x128xf32, #tpu.memory_space<vmem>>, vector<32x128xf32>
      %cst = arith.constant dense<0.000000e+00> : vector<8x128xf32>
      %46 = tpu.matmul %44, %45, %cst {dimension_numbers = #tpu.dot_dimension_numbers<[1], [0], [0], [1], [0, 0, 1, 1], [], []>} : vector<8x32xf32>, vector<32x128xf32>, vector<8x128xf32> -> vector<8x128xf32>
      %c0_15 = arith.constant 0 : index
      %c0_16 = arith.constant 0 : index
      %47 = vector.load %arg9[%c0_15, %c0_16] : memref<1x128xf32, #tpu.memory_space<vmem>>, vector<1x128xf32>
      %48 = vector.broadcast %47 : vector<1x128xf32> to vector<8x128xf32>
      %49 = arith.addf %46, %48 : vector<8x128xf32>
      %50 = tpu.iota {dimensions = array<i32: 1>} : vector<1x128xi32>
      %51 = vector.broadcast %5 : i32 to vector<1x128xi32>
      %52 = arith.addi %51, %50 : vector<1x128xi32>
      %c0_17 = arith.constant 0 : index
      %c0_18 = arith.constant 0 : index
      %53 = vector.load %arg7[%c0_17, %c0_18] : memref<8x4xi32, #tpu.memory_space<vmem>>, vector<8x4xi32>
      %54 = vector.extract_strided_slice %53 {offsets = [0, 0], sizes = [8, 1], strides = [1, 1]} : vector<8x4xi32> to vector<8x1xi32>
      %55 = vector.extract_strided_slice %53 {offsets = [0, 1], sizes = [8, 1], strides = [1, 1]} : vector<8x4xi32> to vector<8x1xi32>
      %56 = vector.extract_strided_slice %53 {offsets = [0, 2], sizes = [8, 1], strides = [1, 1]} : vector<8x4xi32> to vector<8x1xi32>
      %57 = vector.extract_strided_slice %53 {offsets = [0, 3], sizes = [8, 1], strides = [1, 1]} : vector<8x4xi32> to vector<8x1xi32>
      %58 = arith.index_cast %arg1 : i32 to index
      %c0_19 = arith.constant 0 : index
      %c0_20 = arith.constant 0 : index
      %59 = vector.load %arg15[%58, %c0_19, %c0_20] : memref<1x8x1xf32, #tpu.memory_space<vmem>>, vector<1x8x1xf32>
      %60 = vector.shape_cast %59 : vector<1x8x1xf32> to vector<8x1xf32>
      %61 = vector.broadcast %52 : vector<1x128xi32> to vector<8x128xi32>
      %62 = vector.broadcast %54 : vector<8x1xi32> to vector<8x128xi32>
      %63 = arith.cmpi eq, %61, %62 : vector<8x128xi32>
      %cst_21 = arith.constant 0.000000e+00 : f32
      %64 = vector.broadcast %cst_21 : f32 to vector<8x128xf32>
      %65 = arith.select %63, %49, %64 : vector<8x128xi1>, vector<8x128xf32>
      %cst_22 = arith.constant dense<0.000000e+00> : vector<8xf32>
      %66 = vector.multi_reduction <add>, %65, %cst_22 [1] : vector<8x128xf32> to vector<8xf32>
      %67 = vector.shape_cast %66 : vector<8xf32> to vector<8x1xf32>
      %68 = arith.addf %60, %67 : vector<8x1xf32>
      %69 = arith.index_cast %arg1 : i32 to index
      %c0_23 = arith.constant 0 : index
      %c0_24 = arith.constant 0 : index
      %70 = vector.load %arg15[%69, %c0_23, %c0_24] : memref<1x8x1xf32, #tpu.memory_space<vmem>>, vector<1x8x1xf32>
      %71 = vector.shape_cast %70 : vector<1x8x1xf32> to vector<8x1xf32>
      %72 = vector.shape_cast %68 : vector<8x1xf32> to vector<1x8x1xf32>
      tpu.vector_store %arg15[%69, %c0_23, %c0_24], %72 {strides = array<i32>} : memref<1x8x1xf32, #tpu.memory_space<vmem>>, vector<1x8x1xf32>,
      %73 = arith.extui %21 : i1 to i32
      %c0_i32_25 = arith.constant 0 : i32
      %74 = arith.cmpi ne, %73, %c0_i32_25 : i32
      scf.if %74 {
        %77 = arith.index_cast %arg1 : i32 to index
        %c0_27 = arith.constant 0 : index
        %c0_28 = arith.constant 0 : index
        %78 = vector.load %arg16[%77, %c0_27, %c0_28] : memref<1x8x1xf32, #tpu.memory_space<vmem>>, vector<1x8x1xf32>
        %79 = vector.shape_cast %78 : vector<1x8x1xf32> to vector<8x1xf32>
        %80 = vector.broadcast %52 : vector<1x128xi32> to vector<8x128xi32>
        %81 = vector.broadcast %55 : vector<8x1xi32> to vector<8x128xi32>
        %82 = arith.cmpi eq, %80, %81 : vector<8x128xi32>
        %cst_29 = arith.constant 0.000000e+00 : f32
        %83 = vector.broadcast %cst_29 : f32 to vector<8x128xf32>
        %84 = arith.select %82, %49, %83 : vector<8x128xi1>, vector<8x128xf32>
        %cst_30 = arith.constant dense<0.000000e+00> : vector<8xf32>
        %85 = vector.multi_reduction <add>, %84, %cst_30 [1] : vector<8x128xf32> to vector<8xf32>
        %86 = vector.shape_cast %85 : vector<8xf32> to vector<8x1xf32>
        %87 = arith.addf %79, %86 : vector<8x1xf32>
        %88 = arith.index_cast %arg1 : i32 to index
        %c0_31 = arith.constant 0 : index
        %c0_32 = arith.constant 0 : index
        %89 = vector.load %arg16[%88, %c0_31, %c0_32] : memref<1x8x1xf32, #tpu.memory_space<vmem>>, vector<1x8x1xf32>
        %90 = vector.shape_cast %89 : vector<1x8x1xf32> to vector<8x1xf32>
        %91 = vector.shape_cast %87 : vector<8x1xf32> to vector<1x8x1xf32>
        tpu.vector_store %arg16[%88, %c0_31, %c0_32], %91 {strides = array<i32>} : memref<1x8x1xf32, #tpu.memory_space<vmem>>, vector<1x8x1xf32>,
        %c6_i32_33 = arith.constant 6 : i32
        %92 = vector.broadcast %c6_i32_33 : i32 to vector<1x128xi32>
        %93 = arith.cmpi slt, %52, %92 : vector<1x128xi32>
        %cst_34 = arith.constant -1.000000e+30 : f32
        %94 = vector.shape_cast %93 : vector<1x128xi1> to vector<1x128xi1>
        %95 = vector.broadcast %94 : vector<1x128xi1> to vector<8x128xi1>
        %96 = vector.broadcast %cst_34 : f32 to vector<8x128xf32>
        %97 = arith.select %95, %49, %96 : vector<8x128xi1>, vector<8x128xf32>
        %cst_35 = arith.constant dense<0xFF800000> : vector<8xf32>
        %98 = vector.multi_reduction <maximumf>, %97, %cst_35 [1] : vector<8x128xf32> to vector<8xf32>
        %99 = vector.shape_cast %98 : vector<8xf32> to vector<8x1xf32>
        %100 = arith.index_cast %arg1 : i32 to index
        %c0_36 = arith.constant 0 : index
        %c0_37 = arith.constant 0 : index
        %101 = vector.load %arg11[%100, %c0_36, %c0_37] : memref<1x8x1xf32, #tpu.memory_space<vmem>>, vector<1x8x1xf32>
        %102 = vector.shape_cast %101 : vector<1x8x1xf32> to vector<8x1xf32>
        %103 = arith.maximumf %102, %99 : vector<8x1xf32>
        %104 = vector.broadcast %103 : vector<8x1xf32> to vector<8x128xf32>
        %105 = arith.subf %97, %104 : vector<8x128xf32>
        %106 = math.exp %105 : vector<8x128xf32>
        %107 = arith.index_cast %arg1 : i32 to index
        %c0_38 = arith.constant 0 : index
        %c0_39 = arith.constant 0 : index
        %108 = vector.load %arg12[%107, %c0_38, %c0_39] : memref<1x8x1xf32, #tpu.memory_space<vmem>>, vector<1x8x1xf32>
        %109 = vector.shape_cast %108 : vector<1x8x1xf32> to vector<8x1xf32>
        %110 = arith.subf %102, %103 : vector<8x1xf32>
        %111 = math.exp %110 : vector<8x1xf32>
        %112 = arith.mulf %109, %111 : vector<8x1xf32>
        %cst_40 = arith.constant dense<0.000000e+00> : vector<8xf32>
        %113 = vector.multi_reduction <add>, %106, %cst_40 [1] : vector<8x128xf32> to vector<8xf32>
        %114 = vector.shape_cast %113 : vector<8xf32> to vector<8x1xf32>
        %115 = arith.addf %112, %114 : vector<8x1xf32>
        %116 = arith.index_cast %arg1 : i32 to index
        %c0_41 = arith.constant 0 : index
        %c0_42 = arith.constant 0 : index
        %117 = vector.load %arg12[%116, %c0_41, %c0_42] : memref<1x8x1xf32, #tpu.memory_space<vmem>>, vector<1x8x1xf32>
        %118 = vector.shape_cast %117 : vector<1x8x1xf32> to vector<8x1xf32>
        %119 = vector.shape_cast %115 : vector<8x1xf32> to vector<1x8x1xf32>
        tpu.vector_store %arg12[%116, %c0_41, %c0_42], %119 {strides = array<i32>} : memref<1x8x1xf32, #tpu.memory_space<vmem>>, vector<1x8x1xf32>,
        %120 = arith.index_cast %arg1 : i32 to index
        %c0_43 = arith.constant 0 : index
        %c0_44 = arith.constant 0 : index
        %121 = vector.load %arg11[%120, %c0_43, %c0_44] : memref<1x8x1xf32, #tpu.memory_space<vmem>>, vector<1x8x1xf32>
        %122 = vector.shape_cast %121 : vector<1x8x1xf32> to vector<8x1xf32>
        %123 = vector.shape_cast %103 : vector<8x1xf32> to vector<1x8x1xf32>
        tpu.vector_store %arg11[%120, %c0_43, %c0_44], %123 {strides = array<i32>} : memref<1x8x1xf32, #tpu.memory_space<vmem>>, vector<1x8x1xf32>,
      } else {
      }
      %75 = arith.extui %22 : i1 to i32
      %c0_i32_26 = arith.constant 0 : i32
      %76 = arith.cmpi ne, %75, %c0_i32_26 : i32
      scf.if %76 {
        %77 = vector.broadcast %52 : vector<1x128xi32> to vector<8x128xi32>
        %78 = vector.broadcast %56 : vector<8x1xi32> to vector<8x128xi32>
        %79 = arith.cmpi sge, %77, %78 : vector<8x128xi32>
        %80 = vector.broadcast %52 : vector<1x128xi32> to vector<8x128xi32>
        %81 = vector.broadcast %57 : vector<8x1xi32> to vector<8x128xi32>
        %82 = arith.cmpi slt, %80, %81 : vector<8x128xi32>
        %83 = arith.andi %79, %82 : vector<8x128xi1>
        %cst_27 = arith.constant -1.000000e+30 : f32
        %84 = vector.broadcast %cst_27 : f32 to vector<8x128xf32>
        %85 = arith.select %83, %49, %84 : vector<8x128xi1>, vector<8x128xf32>
        %cst_28 = arith.constant dense<0xFF800000> : vector<8xf32>
        %86 = vector.multi_reduction <maximumf>, %85, %cst_28 [1] : vector<8x128xf32> to vector<8xf32>
        %87 = vector.shape_cast %86 : vector<8xf32> to vector<8x1xf32>
        %88 = arith.index_cast %arg1 : i32 to index
        %c0_29 = arith.constant 0 : index
        %c0_30 = arith.constant 0 : index
        %89 = vector.load %arg13[%88, %c0_29, %c0_30] : memref<1x8x1xf32, #tpu.memory_space<vmem>>, vector<1x8x1xf32>
        %90 = vector.shape_cast %89 : vector<1x8x1xf32> to vector<8x1xf32>
        %91 = arith.maximumf %90, %87 : vector<8x1xf32>
        %92 = vector.broadcast %91 : vector<8x1xf32> to vector<8x128xf32>
        %93 = arith.subf %49, %92 : vector<8x128xf32>
        %94 = math.exp %93 : vector<8x128xf32>
        %cst_31 = arith.constant 0.000000e+00 : f32
        %95 = vector.broadcast %cst_31 : f32 to vector<8x128xf32>
        %96 = arith.select %83, %94, %95 : vector<8x128xi1>, vector<8x128xf32>
        %97 = arith.index_cast %arg1 : i32 to index
        %c0_32 = arith.constant 0 : index
        %c0_33 = arith.constant 0 : index
        %98 = vector.load %arg14[%97, %c0_32, %c0_33] : memref<1x8x1xf32, #tpu.memory_space<vmem>>, vector<1x8x1xf32>
        %99 = vector.shape_cast %98 : vector<1x8x1xf32> to vector<8x1xf32>
        %100 = arith.subf %90, %91 : vector<8x1xf32>
        %101 = math.exp %100 : vector<8x1xf32>
        %102 = arith.mulf %99, %101 : vector<8x1xf32>
        %cst_34 = arith.constant dense<0.000000e+00> : vector<8xf32>
        %103 = vector.multi_reduction <add>, %96, %cst_34 [1] : vector<8x128xf32> to vector<8xf32>
        %104 = vector.shape_cast %103 : vector<8xf32> to vector<8x1xf32>
        %105 = arith.addf %102, %104 : vector<8x1xf32>
        %106 = arith.index_cast %arg1 : i32 to index
        %c0_35 = arith.constant 0 : index
        %c0_36 = arith.constant 0 : index
        %107 = vector.load %arg14[%106, %c0_35, %c0_36] : memref<1x8x1xf32, #tpu.memory_space<vmem>>, vector<1x8x1xf32>
        %108 = vector.shape_cast %107 : vector<1x8x1xf32> to vector<8x1xf32>
        %109 = vector.shape_cast %105 : vector<8x1xf32> to vector<1x8x1xf32>
        tpu.vector_store %arg14[%106, %c0_35, %c0_36], %109 {strides = array<i32>} : memref<1x8x1xf32, #tpu.memory_space<vmem>>, vector<1x8x1xf32>,
        %110 = arith.index_cast %arg1 : i32 to index
        %c0_37 = arith.constant 0 : index
        %c0_38 = arith.constant 0 : index
        %111 = vector.load %arg13[%110, %c0_37, %c0_38] : memref<1x8x1xf32, #tpu.memory_space<vmem>>, vector<1x8x1xf32>
        %112 = vector.shape_cast %111 : vector<1x8x1xf32> to vector<8x1xf32>
        %113 = vector.shape_cast %91 : vector<8x1xf32> to vector<1x8x1xf32>
        tpu.vector_store %arg13[%110, %c0_37, %c0_38], %113 {strides = array<i32>} : memref<1x8x1xf32, #tpu.memory_space<vmem>>, vector<1x8x1xf32>,
      } else {
      }
    } else {
    }
    %c0_i32_10 = arith.constant 0 : i32
    %38 = arith.cmpi eq, %arg0, %c0_i32_10 : i32
    %39 = arith.extui %38 : i1 to i32
    %c0_i32_11 = arith.constant 0 : i32
    %40 = arith.cmpi ne, %39, %c0_i32_11 : i32
    scf.if %40 {
      %c0_12 = arith.constant 0 : index
      %c1 = arith.constant 1 : index
      %41 = vector.load %arg7[%c0_12, %c1] : memref<8x4xi32, #tpu.memory_space<vmem>>, vector<8x1xi32>
      %42 = arith.index_cast %arg1 : i32 to index
      %c0_13 = arith.constant 0 : index
      %c0_14 = arith.constant 0 : index
      %43 = vector.load %arg11[%42, %c0_13, %c0_14] : memref<1x8x1xf32, #tpu.memory_space<vmem>>, vector<1x8x1xf32>
      %44 = vector.shape_cast %43 : vector<1x8x1xf32> to vector<8x1xf32>
      %45 = arith.index_cast %arg1 : i32 to index
      %c0_15 = arith.constant 0 : index
      %c0_16 = arith.constant 0 : index
      %46 = vector.load %arg12[%45, %c0_15, %c0_16] : memref<1x8x1xf32, #tpu.memory_space<vmem>>, vector<1x8x1xf32>
      %47 = vector.shape_cast %46 : vector<1x8x1xf32> to vector<8x1xf32>
      %48 = math.log %47 : vector<8x1xf32>
      %49 = arith.addf %44, %48 : vector<8x1xf32>
      %50 = arith.index_cast %arg1 : i32 to index
      %c0_17 = arith.constant 0 : index
      %c0_18 = arith.constant 0 : index
      %51 = vector.load %arg13[%50, %c0_17, %c0_18] : memref<1x8x1xf32, #tpu.memory_space<vmem>>, vector<1x8x1xf32>
      %52 = vector.shape_cast %51 : vector<1x8x1xf32> to vector<8x1xf32>
      %53 = arith.index_cast %arg1 : i32 to index
      %c0_19 = arith.constant 0 : index
      %c0_20 = arith.constant 0 : index
      %54 = vector.load %arg14[%53, %c0_19, %c0_20] : memref<1x8x1xf32, #tpu.memory_space<vmem>>, vector<1x8x1xf32>
      %55 = vector.shape_cast %54 : vector<1x8x1xf32> to vector<8x1xf32>
      %cst = arith.constant 1.000000e-30 : f32
      %56 = vector.broadcast %cst : f32 to vector<8x1xf32>
      %57 = arith.maximumf %55, %56 : vector<8x1xf32>
      %58 = math.log %57 : vector<8x1xf32>
      %59 = arith.addf %52, %58 : vector<8x1xf32>
      %c0_i32_21 = arith.constant 0 : i32
      %60 = vector.broadcast %c0_i32_21 : i32 to vector<8x1xi32>
      %61 = arith.cmpi slt, %41, %60 : vector<8x1xi32>
      %62 = arith.index_cast %arg1 : i32 to index
      %c0_22 = arith.constant 0 : index
      %c0_23 = arith.constant 0 : index
      %63 = vector.load %arg15[%62, %c0_22, %c0_23] : memref<1x8x1xf32, #tpu.memory_space<vmem>>, vector<1x8x1xf32>
      %64 = vector.shape_cast %63 : vector<1x8x1xf32> to vector<8x1xf32>
      %65 = arith.subf %64, %49 : vector<8x1xf32>
      %66 = arith.index_cast %arg1 : i32 to index
      %c0_24 = arith.constant 0 : index
      %c0_25 = arith.constant 0 : index
      %67 = vector.load %arg16[%66, %c0_24, %c0_25] : memref<1x8x1xf32, #tpu.memory_space<vmem>>, vector<1x8x1xf32>
      %68 = vector.shape_cast %67 : vector<1x8x1xf32> to vector<8x1xf32>
      %69 = arith.subf %68, %49 : vector<8x1xf32>
      %70 = arith.index_cast %arg1 : i32 to index
      %c0_26 = arith.constant 0 : index
      %c0_27 = arith.constant 0 : index
      %71 = vector.load %arg15[%70, %c0_26, %c0_27] : memref<1x8x1xf32, #tpu.memory_space<vmem>>, vector<1x8x1xf32>
      %72 = vector.shape_cast %71 : vector<1x8x1xf32> to vector<8x1xf32>
      %73 = arith.subf %72, %59 : vector<8x1xf32>
      %74 = arith.addf %69, %73 : vector<8x1xf32>
      %75 = arith.select %61, %65, %74 : vector<8x1xi1>, vector<8x1xf32>
      %cst_28 = arith.constant 0.000000e+00 : f32
      %76 = vector.broadcast %cst_28 : f32 to vector<8x1xf32>
      %77 = arith.subf %76, %75 : vector<8x1xf32>
      %c0_29 = arith.constant 0 : index
      %c0_30 = arith.constant 0 : index
      %78 = vector.load %arg10[%c0_29, %c0_30] : memref<8x1xf32, #tpu.memory_space<vmem>>, vector<8x1xf32>
      tpu.vector_store %arg10[%c0_29, %c0_30], %77 {strides = array<i32>} : memref<8x1xf32, #tpu.memory_space<vmem>>, vector<8x1xf32>,
    } else {
    }
    return
  }
  func.func @transform_0(%arg0: i32, %arg1: i32, %arg2: memref<1xi32, #tpu.memory_space<smem>>, %arg3: memref<1xi32, #tpu.memory_space<smem>>, %arg4: memref<1xi32, #tpu.memory_space<smem>>, %arg5: memref<1xi32, #tpu.memory_space<smem>>) -> (i32, i32) {
    %c0_i32 = arith.constant 0 : i32
    %c0_i32_0 = arith.constant 0 : i32
    %c0_i32_1 = arith.constant 0 : i32
    return %c0_i32, %c0_i32_0 : i32, i32
  }
  func.func @transform_1(%arg0: i32, %arg1: i32, %arg2: memref<1xi32, #tpu.memory_space<smem>>, %arg3: memref<1xi32, #tpu.memory_space<smem>>, %arg4: memref<1xi32, #tpu.memory_space<smem>>, %arg5: memref<1xi32, #tpu.memory_space<smem>>) -> (i32, i32) {
    %c0_i32 = arith.constant 0 : i32
    %c0_i32_0 = arith.constant 0 : i32
    return %arg1, %c0_i32 : i32, i32
  }
  func.func @transform_2(%arg0: i32, %arg1: i32, %arg2: memref<1xi32, #tpu.memory_space<smem>>, %arg3: memref<1xi32, #tpu.memory_space<smem>>, %arg4: memref<1xi32, #tpu.memory_space<smem>>, %arg5: memref<1xi32, #tpu.memory_space<smem>>) -> (i32, i32) {
    %0 = arith.index_cast %arg0 : i32 to index
    %1 = memref.load %arg2[%0] : memref<1xi32, #tpu.memory_space<smem>>
    %c0_i32 = arith.constant 0 : i32
    %c0_i32_0 = arith.constant 0 : i32
    return %c0_i32, %1 : i32, i32
  }
  func.func @transform_3(%arg0: i32, %arg1: i32, %arg2: memref<1xi32, #tpu.memory_space<smem>>, %arg3: memref<1xi32, #tpu.memory_space<smem>>, %arg4: memref<1xi32, #tpu.memory_space<smem>>, %arg5: memref<1xi32, #tpu.memory_space<smem>>) -> (i32, i32) {
    %0 = arith.index_cast %arg0 : i32 to index
    %1 = memref.load %arg2[%0] : memref<1xi32, #tpu.memory_space<smem>>
    %c0_i32 = arith.constant 0 : i32
    %c0_i32_0 = arith.constant 0 : i32
    return %c0_i32, %1 : i32, i32
  }
  func.func @transform_4(%arg0: i32, %arg1: i32, %arg2: memref<1xi32, #tpu.memory_space<smem>>, %arg3: memref<1xi32, #tpu.memory_space<smem>>, %arg4: memref<1xi32, #tpu.memory_space<smem>>, %arg5: memref<1xi32, #tpu.memory_space<smem>>) -> (i32, i32) {
    %c0_i32 = arith.constant 0 : i32
    %c0_i32_0 = arith.constant 0 : i32
    return %arg1, %c0_i32 : i32, i32
  }
}

</mosaic_0001>

<llo_original>
// kernel: tpu_custom_call.1
$region0: #{tpu_custom_call.1}
  #allocation0 [shape = 'u32[]', space=smem, size = 0x4, offset = 0x4, fixed_abs, tag = 'smem constant byte address 0x4 - core index']
  #allocation1 [shape = 'u32[72,128]{1,0:T(1,128)}', space=vmem, size = 0x9000, scoped, tag = 'internal scratch']
  #allocation2 [shape = 'f32[1,8,1]{2,1,0:T(8,128)}', space=vmem, size = 0x1000, scoped, tag = 'scratch operand']
  #allocation3 [shape = 'f32[1,8,1]{2,1,0:T(8,128)}', space=vmem, size = 0x1000, scoped, tag = 'scratch operand']
  #allocation4 [shape = 'f32[1,8,1]{2,1,0:T(8,128)}', space=vmem, size = 0x1000, scoped, tag = 'scratch operand']
  #allocation5 [shape = 'f32[1,8,1]{2,1,0:T(8,128)}', space=vmem, size = 0x1000, scoped, tag = 'scratch operand']
  #allocation6 [shape = 'f32[1,8,1]{2,1,0:T(8,128)}', space=vmem, size = 0x1000, scoped, tag = 'scratch operand']
  #allocation7 [shape = 'f32[1,8,1]{2,1,0:T(8,128)}', space=vmem, size = 0x1000, scoped, tag = 'scratch operand']
  #allocation8 [shape = 's32[1]{0}', space=sflag, size = 0x4, scoped, tag = 'scoped memory for tpu_custom_call.1']
  #allocation9 [shape = 's32[1]{0:T(128)S(6)}', space=smem, size = 0x200, scoped, tag = 'prefetched SMEM operand 0']
  #allocation10 [shape = 's32[1]{0:T(128)S(6)}', space=smem, size = 0x200, scoped, tag = 'prefetched SMEM operand 1']
  #allocation11 [shape = 's32[1]{0:T(128)S(6)}', space=smem, size = 0x200, scoped, tag = 'prefetched SMEM operand 2']
  #allocation12 [shape = 's32[1]{0:T(128)S(6)}', space=smem, size = 0x200, scoped, tag = 'prefetched SMEM operand 3']
  %s0 = inlined_call_operand.<no memory space> [shape: s32[1], index: 0, kind: input, shape index: {}]
  %s1 = inlined_call_operand.<no memory space> [shape: s32[1], index: 1, kind: input, shape index: {}]
  %s2 = inlined_call_operand.<no memory space> [shape: s32[1], index: 2, kind: input, shape index: {}]
  %s3 = inlined_call_operand.<no memory space> [shape: s32[1], index: 3, kind: input, shape index: {}]
  %s4 = inlined_call_operand.vmem [shape: f32[8,32], index: 4, kind: input, shape index: {}]
  %s5 = inlined_call_operand.vmem [shape: s32[8,4], index: 5, kind: input, shape index: {}]
  %s6 = inlined_call_operand.hbm [shape: f32[32,128], index: 6, kind: input, shape index: {}]
  %s7 = inlined_call_operand.vmem [shape: f32[1,128], index: 7, kind: input, shape index: {}]
  %s8 = inlined_call_operand.vmem [shape: f32[8,1], index: 8, kind: output, shape index: {}]
  %s9 = sld [smem:[#allocation0]]
  $region50: #{tpu_custom_call.1} parent=0
    _
  %s11 = ssub.s32 1, %s9
  %s12 = scalar_select 0, %s11, %s9
  %13 = sst [smem:[#allocation9]] %s0
  %14 = sst [smem:[#allocation10]] %s1
  %15 = sst [smem:[#allocation11]] %s2
  %16 = sst [smem:[#allocation12]] %s3
  $region1: #{tpu_custom_call.1} parent=0
    #allocation13 [shape = 'u8[16384]{0}', space=vmem, size = 0x4000, scoped, tag = 'input window, operand 6, single buffered']
    #allocation14 [shape = 's32[1]{0}', space=sflag, size = 0x4, scoped, tag = 'scoped memory for tpu_custom_call.1']
    %17 = vsyncpa [#allocation14], 0
    // Predicated region
    $region2: #{tpu_custom_call.1} parent=1 // pred_check
      _
    $region3: #{tpu_custom_call.1} parent=1 // pred_check_branch
      %19 = sbr.rel (0) target = $region5
    $region4: #{tpu_custom_call.1} parent=1 // pred_region
      _
    $region5: #{tpu_custom_call.1} parent=1 // pred_fallthru
      _
    // Predicated region
    $region6: #{tpu_custom_call.1} parent=1 // pred_check
      _
    $region7: #{tpu_custom_call.1} parent=1 // pred_check_branch
      %21 = sbr.rel (0) target = $region9
    $region8: #{tpu_custom_call.1} parent=1 // pred_region
      _
    $region9: #{tpu_custom_call.1} parent=1 // pred_fallthru
      _
    // Predicated region
    $region10: #{tpu_custom_call.1} parent=1 // pred_check
      _
    $region11: #{tpu_custom_call.1} parent=1 // pred_check_branch
      %23 = sbr.rel (0) target = $region13
    $region12: #{tpu_custom_call.1} parent=1 // pred_region
      %s24 = sld [smem:[#allocation9]]
      %26 = vsyncadd [#allocation14], 0
      %s27 = smul.addr %s24, 8
      %s28 = scalar_lea.hbm %s6, %s27
      %s29 = sshll.u32 %s28, 4
      %s30 = int_to_ptr.hbm [resolvable:$true] %s29
      %s31 = sshll.u32 [#allocation13], 4
      %s32 = int_to_ptr.vmem [resolvable:$true] %s31
      %37 = dma.hbm_to_vmem [thread:$0]  %s30, 512, %s32, [#allocation14], 128, 128, 8
    $region13: #{tpu_custom_call.1} parent=1 // pred_fallthru
      _
    // Predicated region
    $region14: #{tpu_custom_call.1} parent=1 // pred_check
      _
    $region15: #{tpu_custom_call.1} parent=1 // pred_check_branch
      %39 = sbr.rel (0) target = $region17
    $region16: #{tpu_custom_call.1} parent=1 // pred_region
      %s40 = sld [smem:[#allocation9]]
      %p41 = scmp.lt.s32.totalorder %s40, 0
      %s42 = scalar_select %p41, %s40, 0
      %s43 = scalar_lea.vmem %s7, %s42
      %s44 = sld [smem:[#allocation9]]
    $region17: #{tpu_custom_call.1} parent=1 // pred_fallthru
      _
    // Predicated region
    $region18: #{tpu_custom_call.1} parent=1 // pred_check
      _
    $region19: #{tpu_custom_call.1} parent=1 // pred_check_branch
      %46 = sbr.rel (0) target = $region21
    $region20: #{tpu_custom_call.1} parent=1 // pred_region
      %48 = dma.done [#allocation14], 512
    $region21: #{tpu_custom_call.1} parent=1 // pred_fallthru
      _
    %s49 = sld [smem:[#allocation9]]
    %p50 = scmp.lt.s32.totalorder %s49, 0
    %s51 = scalar_select %p50, %s49, 0
    %s52 = scalar_lea.vmem %s7, %s51
    %s53 = sld [smem:[#allocation9]]
    %s54 = sld [smem:[#allocation9]]
    %p55 = scmp.lt.s32.totalorder %s54, 0
    %s56 = scalar_select %p55, %s54, 0
    %s57 = scalar_lea.vmem %s7, %s56
    %s58 = sld [smem:[#allocation9]]
    %p59 = scmp.eq.s32.totalorder 0, 0
    // Predicated region
    $region22: #{tpu_custom_call.1} parent=1 // pred_check
      %p60 = pneg %p59
    $region23: #{tpu_custom_call.1} parent=1 // pred_check_branch
      %62 = sbr.rel (%p60) target = $region25
    $region24: #{tpu_custom_call.1} parent=1 // pred_region
      %s63 = smul.u32 0, 8
      %s64 = scalar_lea.vmem [#allocation2], %s63
      %vm65 = vcmask 7168
      %66 = vst.msk [vmem:[%s64] sm:$0xff] %vm65, -1e+30
      %s67 = scalar_lea.vmem [#allocation4], %s63
      %68 = vst.msk [vmem:[%s67] sm:$0xff] %vm65, -1e+30
      %s69 = scalar_lea.vmem [#allocation3], %s63
      %70 = vst.msk [vmem:[%s69] sm:$0xff] %vm65, 0.0
      %s71 = scalar_lea.vmem [#allocation5], %s63
      %72 = vst.msk [vmem:[%s71] sm:$0xff] %vm65, 0.0
      %s73 = scalar_lea.vmem [#allocation6], %s63
      %74 = vst.msk [vmem:[%s73] sm:$0xff] %vm65, 0.0
      %s75 = scalar_lea.vmem [#allocation7], %s63
      %76 = vst.msk [vmem:[%s75] sm:$0xff] %vm65, 0.0
    $region25: #{tpu_custom_call.1} parent=1 // pred_fallthru
      _
    %s77 = sld [smem:[#allocation9]]
    %s78 = smul.u32 %s77, 128
    %s79 = sadd.s32 %s78, 128
    %p80 = scmp.lt.s32.totalorder %s79, 22
    %s81 = scalar_select %p80, %s79, 22
    %s82 = ssub.s32 %s81, 1
    %p83 = scmp.ge.s32.totalorder %s78, 6
    %s84 = scalar_select %p83, 1, 0
    %p85 = scmp.ge.s32.totalorder %s82, 6
    %s86 = scalar_select %p85, 1, 0
    %p87 = scmp.ge.s32.totalorder %s78, 12
    %s88 = scalar_select %p87, 1, 0
    %s89 = sadd.s32 %s84, %s88
    %p90 = scmp.ge.s32.totalorder %s82, 12
    %s91 = scalar_select %p90, 1, 0
    %s92 = sadd.s32 %s86, %s91
    %p93 = scmp.eq.s32.totalorder %s89, 0
    %p94 = scmp.ge.s32.totalorder %s92, 1
    %s95 = sld [smem:[#allocation11]]
    %s96 = sld [smem:[#allocation12]]
    %p97 = scmp.gt.s32.totalorder %s89, 1
    %s98 = scalar_select %p97, %s89, 1
    %p99 = scmp.le.s32.totalorder %s98, %s96
    %p100 = pnand %p94, %p99
    %p101 = pneg %p100
    %p102 = scmp.ge.s32.totalorder %s92, %s95
    %p103 = pnand %p101, %p102
    %p104 = pneg %p103
    %s105 = sld [smem:[#allocation10]]
    %p106 = scmp.lt.s32.totalorder 0, %s105
    %p107 = por %p93, %p104
    %p108 = pnand %p106, %p107
    %p109 = pneg %p108
    // Predicated region
    $region26: #{tpu_custom_call.1} parent=1 // pred_check
      _
    $region27: #{tpu_custom_call.1} parent=1 // pred_check_branch
      %111 = sbr.rel (%p108) target = $region29
    $region28: #{tpu_custom_call.1} parent=1 // pred_region
      %s112 = smul.u32 0, 8
      %s113 = scalar_lea.vmem %s4, %s112
      %v114 = vld [vmem:[%s113] sm:$0xff]
      %v115 = vld [vmem:[#allocation13] sm:$0xff]
      %v116 = vld [vmem:[#allocation13 + $0x8] sm:$0xff]
      %v117 = vld [vmem:[#allocation13 + $0x10] sm:$0xff]
      %v118 = vld [vmem:[#allocation13 + $0x18] sm:$0xff]
      %v119 = vld [vmem:[%s57] sm:$0x1]
      %v121 = vperm.slane %v119, 0
      %vm123 = vcmask 261120
      %v125 = vsel %vm123, %v114, 0
      %127 = vmatpush.msra.mxu0 0.0
      %128 = vmatpush.msra.mxu0 0.0
      %129 = vmatpush.msra.mxu0 0.0
      %130 = vmatpush.msra.mxu0 0.0
      %131 = vmatpush.msra.mxu0 0.0
      %132 = vmatpush.msra.mxu0 0.0
      %133 = vmatpush.msra.mxu0 0.0
      %134 = vmatpush.msra.mxu0 0.0
      %135 = vmatpush.msra.mxu0 0.0
      %136 = vmatpush.msra.mxu0 0.0
      %137 = vmatpush.msra.mxu0 0.0
      %138 = vmatpush.msra.mxu0 0.0
      %139 = vmatpush.msra.mxu0 %v118
      %140 = vmatpush.msra.mxu0 %v117
      %141 = vmatpush.msra.mxu0 %v116
      %142 = vmatpush.msra.mxu0 %v115
      %143 = vmatmul.f32.gmra.mxu0 %v125
      %v144 = vpop.f32.mrf.mxu0
      %v145 = vadd.f32 %v121, %v144
      %146 = vdwg.mxu0
      %v147 = vlaneseq
      %v148 = vand.u32 %v147, 127
      %v149 = vstv %s78
      %v150 = vadd.s32 %v149, %v148
      %v151 = vld [vmem:[%s5] sm:$0xff]
      %s152 = scalar_lea.vmem [#allocation6], %s112
      %v153 = vld [vmem:[%s152] sm:$0xff]
      %154 = vset.pattern.permute.xlu0 0
      %155 = vperm.xlu0 %154, %v151
      %v156 = vpop.permute.xlu0 %155
      %vm157 = vcmp.eq.s32.totalorder %v150, %v156
      %v158 = vsel %vm157, %v145, 0.0
      %159 = vadd.xlane.f32.xlu0 %v158
      %v160 = vpop.xlane.xlu0 %159
      %v161 = vadd.f32 %v153, %v160
      %vm162 = vcmask 7168
      %163 = vst.msk [vmem:[%s152] sm:$0xff] %vm162, %v161
      // Predicated region
      $region30: #{tpu_custom_call.1} parent=28 // pred_check
        %p164 = pneg %p93
      $region31: #{tpu_custom_call.1} parent=28 // pred_check_branch
        %166 = sbr.rel (%p164) target = $region33
      $region32: #{tpu_custom_call.1} parent=28 // pred_region
        %s167 = scalar_lea.vmem [#allocation7], %s112
        %v168 = vld [vmem:[%s167] sm:$0xff]
        %169 = vset.pattern.permute.xlu0 1
        %170 = vperm.xlu0 %169, %v151
        %v171 = vpop.permute.xlu0 %170
        %vm172 = vcmp.eq.s32.totalorder %v150, %v171
        %v173 = vsel %vm172, %v145, 0.0
        %174 = vadd.xlane.f32.xlu0 %v173
        %v175 = vpop.xlane.xlu0 %174
        %v176 = vadd.f32 %v168, %v175
        %177 = vst.msk [vmem:[%s167] sm:$0xff] %vm162, %v176
        %vm178 = vcmp.lt.s32.totalorder %v150, 6
        %v179 = vsel %vm178, 1, 0
        %vm180 = vcmp.eq.s32.totalorder %v179, 1
        %v181 = vsel %vm180, %v145, -1e+30
        %182 = vmax.xlane.f32.xlu0 %v181
        %v183 = vpop.xlane.xlu0 %182
        %s184 = scalar_lea.vmem [#allocation2], %s112
        %v185 = vld [vmem:[%s184] sm:$0xff]
        %v186 = vmax.f32 %v185, %v183
        %188 = vset.pattern.permute.xlu0 0
        %189 = vperm.xlu0 %188, %v186
        %v190 = vpop.permute.xlu0 %189
        %v192 = vsub.f32 %v181, %v190
        %v193 = vmul.f32 %v192, 1.442695
        %v194 = vpow.pop %v193
        %s195 = scalar_lea.vmem [#allocation3], %s112
        %v196 = vld [vmem:[%s195] sm:$0xff]
        %v197 = vsub.f32 %v185, %v186
        %v198 = vmul.f32 %v197, 1.442695
        %v199 = vpow.pop %v198
        %v200 = vmul.f32 %v196, %v199
        %201 = vadd.xlane.f32.xlu0 %v194
        %v202 = vpop.xlane.xlu0 %201
        %v203 = vadd.f32 %v200, %v202
        %204 = vst.msk [vmem:[%s195] sm:$0xff] %vm162, %v203
        %205 = vst.msk [vmem:[%s184] sm:$0xff] %vm162, %v186
      $region33: #{tpu_custom_call.1} parent=28 // pred_fallthru
        _
      // Predicated region
      $region34: #{tpu_custom_call.1} parent=28 // pred_check
        %p206 = pneg %p94
      $region35: #{tpu_custom_call.1} parent=28 // pred_check_branch
        %208 = sbr.rel (%p206) target = $region37
      $region36: #{tpu_custom_call.1} parent=28 // pred_region
        %209 = vset.pattern.permute.xlu0 2
        %210 = vperm.xlu0 %209, %v151
        %v211 = vpop.permute.xlu0 %210
        %vm212 = vcmp.ge.s32.totalorder %v150, %v211
        %213 = vset.pattern.permute.xlu0 3
        %214 = vperm.xlu0 %213, %v151
        %v215 = vpop.permute.xlu0 %214
        %vm216 = vcmp.lt.s32.totalorder %v150, %v215
        %vm217 = vmand %vm212, %vm216
        %v218 = vsel %vm217, %v145, -1e+30
        %219 = vmax.xlane.f32.xlu0 %v218
        %v220 = vpop.xlane.xlu0 %219
        %s221 = scalar_lea.vmem [#allocation4], %s112
        %v222 = vld [vmem:[%s221] sm:$0xff]
        %v223 = vmax.f32 %v222, %v220
        %225 = vset.pattern.permute.xlu0 0
        %226 = vperm.xlu0 %225, %v223
        %v227 = vpop.permute.xlu0 %226
        %v229 = vsub.f32 %v145, %v227
        %v230 = vmul.f32 %v229, 1.442695
        %v231 = vpow.pop %v230
        %v232 = vsel %vm217, %v231, 0.0
        %s233 = scalar_lea.vmem [#allocation5], %s112
        %v234 = vld [vmem:[%s233] sm:$0xff]
        %v235 = vsub.f32 %v222, %v223
        %v236 = vmul.f32 %v235, 1.442695
        %v237 = vpow.pop %v236
        %v238 = vmul.f32 %v234, %v237
        %239 = vadd.xlane.f32.xlu0 %v232
        %v240 = vpop.xlane.xlu0 %239
        %v241 = vadd.f32 %v238, %v240
        %242 = vst.msk [vmem:[%s233] sm:$0xff] %vm162, %v241
        %243 = vst.msk [vmem:[%s221] sm:$0xff] %vm162, %v223
      $region37: #{tpu_custom_call.1} parent=28 // pred_fallthru
        _
    $region29: #{tpu_custom_call.1} parent=1 // pred_fallthru
      _
    // Predicated region
    $region38: #{tpu_custom_call.1} parent=1 // pred_check
      %p244 = pneg %p59
    $region39: #{tpu_custom_call.1} parent=1 // pred_check_branch
      %246 = sbr.rel (%p244) target = $region41
    $region40: #{tpu_custom_call.1} parent=1 // pred_region
      %v247 = vld [vmem:[%s5] sm:$0xff]
      %s248 = smul.u32 0, 8
      %s249 = scalar_lea.vmem [#allocation2], %s248
      %v250 = vld [vmem:[%s249] sm:$0xff]
      %s251 = scalar_lea.vmem [#allocation3], %s248
      %v252 = vld [vmem:[%s251] sm:$0xff]
      %v253 = vlog2.pop %v252
      %v254 = vmul.f32 %v253, 0.6931472
      %v255 = vadd.f32 %v250, %v254
      %s256 = scalar_lea.vmem [#allocation4], %s248
      %v257 = vld [vmem:[%s256] sm:$0xff]
      %s258 = scalar_lea.vmem [#allocation5], %s248
      %v259 = vld [vmem:[%s258] sm:$0xff]
      %v260 = vmax.f32 %v259, 1e-30
      %v261 = vlog2.pop %v260
      %v262 = vmul.f32 %v261, 0.6931472
      %v263 = vadd.f32 %v257, %v262
      %vm264 = vcmp.lt.s32.totalorder %v247, 0
      %s265 = scalar_lea.vmem [#allocation6], %s248
      %v266 = vld [vmem:[%s265] sm:$0xff]
      %v267 = vsub.f32 %v266, %v255
      %s268 = scalar_lea.vmem [#allocation7], %s248
      %v269 = vld [vmem:[%s268] sm:$0xff]
      %v270 = vsub.f32 %v269, %v255
      %v271 = vsub.f32 %v266, %v263
      %v272 = vadd.f32 %v270, %v271
      %274 = vrot.lane.b32.xlu0 %v267, 1
      %v275 = vpop.permute.xlu0 %274
      %278 = vrot.lane.b32.xlu0 %v272, 1
      %v279 = vpop.permute.xlu0 %278
      %v281 = vsel %vm264, %v275, %v279
      %v282 = vsub.f32 0.0, %v281
      %284 = vrot.lane.b32.xlu0 %v282, 127
      %v285 = vpop.permute.xlu0 %284
      %vm287 = vcmask 7168
      %288 = vst.msk [vmem:[%s8] sm:$0xff] %vm287, %v285
    $region41: #{tpu_custom_call.1} parent=1 // pred_fallthru
      _
    // Predicated region
    $region42: #{tpu_custom_call.1} parent=1 // pred_check
      _
    $region43: #{tpu_custom_call.1} parent=1 // pred_check_branch
      %290 = sbr.rel (0) target = $region45
    $region44: #{tpu_custom_call.1} parent=1 // pred_region
      _
    $region45: #{tpu_custom_call.1} parent=1 // pred_fallthru
      _
    // Predicated region
    $region46: #{tpu_custom_call.1} parent=1 // pred_check
      _
    $region47: #{tpu_custom_call.1} parent=1 // pred_check_branch
      %292 = sbr.rel (0) target = $region49
    $region48: #{tpu_custom_call.1} parent=1 // pred_region
      _
    $region49: #{tpu_custom_call.1} parent=1 // pred_fallthru
      _
    %293 = vsyncpa [#allocation14], 1

</llo_original>
